<compile_context>
chip_gen: v5e
topology: v5e:2x2
jax: 0.10.0
libtpu: 0.0.40
codegen_flags: <defaults>
</compile_context>

<pallas_src>
import jax
import jax.numpy as jnp
from jax.experimental import pallas as pl
from jax.experimental.pallas import tpu as pltpu

_LANES = 128
_MIN_BLOCK_BYTES = 512 << 10  # ~512 KiB: smallest block worth a pipeline step


def _smoothstep_kernel(x_ref, o_ref, *, lower, upper, a3, a1, a0):
    # f32 compute guards low-precision coefficient overflow; cast at the store.
    x = x_ref[...].astype(jnp.float32)
    # clip + Horner replaces the reference's two nested where-selects; the
    # clamped argument makes the cubic itself produce the 0 / 1 plateaus.
    xc = jnp.clip(x, lower, upper)
    y = (a3 * xc * xc + a1) * xc + a0
    # Exact saturation: plateaus can otherwise be a few ulps outside [0, 1].
    y = jnp.clip(y, 0.0, 1.0)
    o_ref[...] = y.astype(o_ref.dtype)


def _default_block_bytes() -> int:
    """Generation-aware block-size target."""
    try:
        kind = jax.devices()[0].device_kind.lower()
    except Exception:  # pragma: no cover - CPU / interpret fallback
        kind = ""
    if "v7" in kind or "7x" in kind:
        # v7x: ~3.2 TB/s HBM -> bigger blocks re-amortize per-step overhead.
        return 8 << 20
    # v5e / v6e: 4 MiB is at the measured 85-86% elementwise roofline.
    return 4 << 20


def smooth_step(x, gamma: float = 1.0, *, target_block_bytes: int | None = None):
    """Elementwise SmoothStep. Accepts any shape / float dtype, returns same."""
    lower = -gamma / 2.0
    upper = gamma / 2.0
    a3 = -2.0 / gamma**3
    a1 = 3.0 / (2.0 * gamma)
    a0 = 0.5

    orig_shape = x.shape
    orig_dtype = x.dtype
    itemsize = jnp.dtype(orig_dtype).itemsize
    n = x.size
    if n == 0:
        return jnp.reshape(x, orig_shape)

    if target_block_bytes is None:
        target_block_bytes = _default_block_bytes()

    # Sublane packing is dtype dependent: 8 rows (f32), 16 (bf16/f16), 32 (8b).
    pack = max(8, 32 // itemsize)

    # ---- choose a zero-copy 2-D slab view -------------------------------
    pad = 0
    if n % _LANES == 0:
        # Lane-dense fast path: pure bitcast reshape.
        cols = _LANES
        rows = n // _LANES
    else:
        # Zero-copy unaligned path: collapse trailing dims into the lane axis,
        # stopping at the smallest product >= 128 (keeps stores mostly lane
        # dense). The lane dim equals the full array dim, which the (8,128)
        # block rule allows; no pad, no slice, kernel traffic stays 2N bytes.
        cols = 1
        for d in reversed(orig_shape):
            cols *= int(d)
            if cols >= _LANES:
                break
        if pack * cols * itemsize <= target_block_bytes:
            rows = n // cols  # trailing-dim products always divide n exactly
        else:
            # Pathological: huge, non-128-aligned trailing dim. Fall back to
            # the (copying) pad-to-128 path; rare and still correct.
            cols = _LANES
            rows = pl.cdiv(n, _LANES)
            pad = rows * _LANES - n

    if pad > 0:
        flat = jnp.concatenate([x.reshape(-1), jnp.zeros((pad,), orig_dtype)])
        slab = flat.reshape(rows, cols)
    else:
        slab = x.reshape(rows, cols)

    # ---- tiling ----------------------------------------------------------
    lane_bytes = cols * itemsize
    target_rows = max(pack, (target_block_bytes // lane_bytes) // pack * pack)
    rows_ceil = pl.cdiv(rows, pack) * pack
    array_bytes = rows * lane_bytes

    # Ensure >= 2 evenly sized grid steps when the array can afford blocks of
    # at least ~512 KiB: lets v7x shard the parallel axis over its 2 TCs and
    # overlaps adjacent steps' in/out DMAs.
    if array_bytes >= 2 * _MIN_BLOCK_BYTES:
        half_rows = pl.cdiv(rows_ceil // 2, pack) * pack
        target_rows = min(target_rows, max(half_rows, pack))

    # Multiple of `pack`, or the full row extent (both satisfy the tiling rule);
    # partial last blocks are masked by Pallas.
    tile_rows = min(target_rows, rows)
    grid = (pl.cdiv(rows, tile_rows),)

    # VMEM: in + out, double-buffered (default), +30% headroom.  Floor 32 MiB
    # (above v5e's 16 MiB scoped default); cap 48 MiB so v7x (64 MiB physical)
    # keeps room for compiler-internal scratch.
    block_bytes = tile_rows * lane_bytes
    vmem_limit = min(48 << 20, max(32 << 20, int(4 * block_bytes * 1.3)))

    kernel = lambda x_ref, o_ref: _smoothstep_kernel(
        x_ref, o_ref, lower=lower, upper=upper, a3=a3, a1=a1, a0=a0
    )

    out_slab = pl.pallas_call(
        kernel,
        out_shape=jax.ShapeDtypeStruct((rows, cols), orig_dtype),
        grid_spec=pltpu.PrefetchScalarGridSpec(
            num_scalar_prefetch=0,
            grid=grid,
            in_specs=[pl.BlockSpec((tile_rows, cols), lambda i: (i, 0))],
            out_specs=pl.BlockSpec((tile_rows, cols), lambda i: (i, 0)),
        ),
        compiler_params=pltpu.CompilerParams(
            dimension_semantics=("parallel",),
            vmem_limit_bytes=vmem_limit,
        ),
        cost_estimate=pl.CostEstimate(
            flops=9 * n, transcendentals=0, bytes_accessed=2 * n * itemsize
        ),
    )(slab)

    if pad > 0:
        return out_slab.reshape(-1)[:n].reshape(orig_shape)
    return out_slab.reshape(orig_shape)


def _smooth_step_ref(x, gamma: float = 1.0):
    """Pure-JAX reference mirroring the PyTorch module (nested where)."""
    lower = -gamma / 2.0
    upper = gamma / 2.0
    a3 = -2.0 / gamma**3
    a1 = 3.0 / (2.0 * gamma)
    a0 = 0.5
    poly = a3 * x**3 + a1 * x + a0
    return jnp.where(
        x <= lower,
        jnp.zeros_like(x),
        jnp.where(x >= upper, jnp.ones_like(x), poly),
    )


if __name__ == "__main__":
    key = jax.random.PRNGKey(0)
    k1, k2 = jax.random.split(key)

    # NCHW-style input as the PyTorch adapter would see it (128-aligned numel).
    x = jax.random.normal(k1, (2, 4, 16, 16), dtype=jnp.float32)
    y = jax.block_until_ready(smooth_step(x, gamma=1.0))
    assert y.shape == x.shape and y.dtype == x.dtype
    assert jnp.allclose(y, _smooth_step_ref(x, gamma=1.0), atol=1e-6, rtol=1e-6)

    # Non-128-aligned numel -> zero-copy trailing-dim slab path (no pad/slice).
    x2 = jax.random.normal(k2, (7, 130), dtype=jnp.float32)
    y2 = jax.block_until_ready(smooth_step(x2, gamma=1.0))
    assert y2.shape == x2.shape and y2.dtype == x2.dtype
    assert jnp.allclose(y2, _smooth_step_ref(x2, gamma=1.0), atol=1e-6, rtol=1e-6)

    # gamma != 1 exercises the inexact plateaus + final clamp.
    y3 = jax.block_until_ready(smooth_step(x, gamma=0.5))
    assert jnp.allclose(y3, _smooth_step_ref(x, gamma=0.5), atol=1e-5, rtol=1e-5)

    print("KERNEL_OK")
</pallas_src>

<mosaic_0001>
module attributes {stable_mosaic.version = 11 : i64} {
  func.func @_lambda_(%arg0: i32, %arg1: memref<16x128xf32, #tpu.memory_space<vmem>>, %arg2: memref<16x128xf32, #tpu.memory_space<vmem>>) attributes {dimension_semantics = [#tpu.dimension_semantics<parallel>], iteration_bounds = array<i64: 1>, scalar_prefetch = 0 : i64, scratch_operands = 0 : i64, tpu.core_type = #tpu.core_type<tc>, window_params = [{transform_indices = @transform_0, window_bounds = array<i64: 16, 128>}, {transform_indices = @transform_1, window_bounds = array<i64: 16, 128>}]} {
    %c0 = arith.constant 0 : index
    %c0_0 = arith.constant 0 : index
    %0 = vector.load %arg1[%c0, %c0_0] : memref<16x128xf32, #tpu.memory_space<vmem>>, vector<16x128xf32>
    %cst = arith.constant -5.000000e-01 : f32
    %cst_1 = arith.constant 5.000000e-01 : f32
    %1 = vector.broadcast %cst : f32 to vector<16x128xf32>
    %2 = arith.maximumf %1, %0 : vector<16x128xf32>
    %3 = vector.broadcast %cst_1 : f32 to vector<16x128xf32>
    %4 = arith.minimumf %3, %2 : vector<16x128xf32>
    %cst_2 = arith.constant -2.000000e+00 : f32
    %5 = vector.broadcast %cst_2 : f32 to vector<16x128xf32>
    %6 = arith.mulf %5, %4 : vector<16x128xf32>
    %7 = arith.mulf %6, %4 : vector<16x128xf32>
    %cst_3 = arith.constant 1.500000e+00 : f32
    %8 = vector.broadcast %cst_3 : f32 to vector<16x128xf32>
    %9 = arith.addf %7, %8 : vector<16x128xf32>
    %10 = arith.mulf %9, %4 : vector<16x128xf32>
    %cst_4 = arith.constant 5.000000e-01 : f32
    %11 = vector.broadcast %cst_4 : f32 to vector<16x128xf32>
    %12 = arith.addf %10, %11 : vector<16x128xf32>
    %cst_5 = arith.constant 0.000000e+00 : f32
    %cst_6 = arith.constant 1.000000e+00 : f32
    %13 = vector.broadcast %cst_5 : f32 to vector<16x128xf32>
    %14 = arith.maximumf %13, %12 : vector<16x128xf32>
    %15 = vector.broadcast %cst_6 : f32 to vector<16x128xf32>
    %16 = arith.minimumf %15, %14 : vector<16x128xf32>
    %c0_7 = arith.constant 0 : index
    %c0_8 = arith.constant 0 : index
    %17 = vector.load %arg2[%c0_7, %c0_8] : memref<16x128xf32, #tpu.memory_space<vmem>>, vector<16x128xf32>
    tpu.vector_store %arg2[%c0_7, %c0_8], %16 {strides = array<i32>} : memref<16x128xf32, #tpu.memory_space<vmem>>, vector<16x128xf32>,
    return
  }
  func.func @transform_0(%arg0: i32) -> (i32, i32) {
    %c0_i32 = arith.constant 0 : i32
    %c0_i32_0 = arith.constant 0 : i32
    return %arg0, %c0_i32 : i32, i32
  }
  func.func @transform_1(%arg0: i32) -> (i32, i32) {
    %c0_i32 = arith.constant 0 : i32
    %c0_i32_0 = arith.constant 0 : i32
    return %arg0, %c0_i32 : i32, i32
  }
}

</mosaic_0001>

<llo_original>
// kernel: tpu_custom_call.1
$region0: #{tpu_custom_call.1}
  #allocation0 [shape = 'u32[]', space=smem, size = 0x4, offset = 0x4, fixed_abs, tag = 'smem constant byte address 0x4 - core index']
  #allocation1 [shape = 'u32[72,128]{1,0:T(1,128)}', space=vmem, size = 0x9000, scoped, tag = 'internal scratch']
  %s0 = inlined_call_operand.hbm [shape: f32[16,128], index: 0, kind: input, shape index: {}]
  %s1 = inlined_call_operand.hbm [shape: f32[16,128], index: 1, kind: output, shape index: {}]
  %s2 = sld [smem:[#allocation0]]
  $region18: #{tpu_custom_call.1} parent=0
    _
  %s4 = ssub.s32 1, %s2
  %s5 = scalar_select 0, %s4, %s2
  $region1: #{tpu_custom_call.1} parent=0
    #allocation2 [shape = 'u8[8192]{0}', space=vmem, size = 0x2000, scoped, tag = 'input window, operand 0, single buffered']
    #allocation3 [shape = 's32[1]{0}', space=sflag, size = 0x4, scoped, tag = 'scoped memory for tpu_custom_call.1']
    #allocation4 [shape = 's32[1]{0}', space=sflag, size = 0x4, scoped, tag = 'scoped memory for tpu_custom_call.1']
    #allocation5 [shape = 'u8[8192]{0}', space=vmem, size = 0x2000, scoped, tag = 'output window, operand 0, single buffered']
    %6 = vsyncpa [#allocation3], 0
    %7 = vsyncpa [#allocation4], 0
    // Predicated region
    $region2: #{tpu_custom_call.1} parent=1 // pred_check
      _
    $region3: #{tpu_custom_call.1} parent=1 // pred_check_branch
      %9 = sbr.rel (0) target = $region5
    $region4: #{tpu_custom_call.1} parent=1 // pred_region
      %11 = vsyncadd [#allocation3], 0
      %s12 = sshll.u32 %s0, 4
      %s13 = int_to_ptr.hbm [resolvable:$true] %s12
      %s14 = sshll.u32 [#allocation2], 4
      %s15 = int_to_ptr.vmem [resolvable:$true] %s14
      %20 = dma.hbm_to_vmem [thread:$0]  %s13, 256, %s15, [#allocation3], 128, 128, 8
    $region5: #{tpu_custom_call.1} parent=1 // pred_fallthru
      _
    // Predicated region
    $region6: #{tpu_custom_call.1} parent=1 // pred_check
      _
    $region7: #{tpu_custom_call.1} parent=1 // pred_check_branch
      %22 = sbr.rel (0) target = $region9
    $region8: #{tpu_custom_call.1} parent=1 // pred_region
      %24 = dma.done [#allocation3], 256
    $region9: #{tpu_custom_call.1} parent=1 // pred_fallthru
      _
    %v25 = vld [vmem:[#allocation2] sm:$0xff]
    %v26 = vld [vmem:[#allocation2 + $0x8] sm:$0xff]
    %v27 = vmax.f32 %v25, -0.5
    %v28 = vmax.f32 %v26, -0.5
    %v29 = vmin.f32 %v27, 0.5
    %v30 = vmin.f32 %v28, 0.5
    %v31 = vmul.f32 %v29, -2.0
    %v32 = vmul.f32 %v30, -2.0
    %v33 = vmul.f32 %v31, %v29
    %v34 = vmul.f32 %v32, %v30
    %v35 = vadd.f32 %v33, 1.5
    %v36 = vadd.f32 %v34, 1.5
    %v37 = vmul.f32 %v35, %v29
    %v38 = vmul.f32 %v36, %v30
    %v39 = vadd.f32 %v37, 0.5
    %v40 = vadd.f32 %v38, 0.5
    %v41 = vmax.f32 %v39, 0.0
    %v42 = vmax.f32 %v40, 0.0
    %v43 = vmin.f32 %v41, 1.0
    %v44 = vmin.f32 %v42, 1.0
    %45 = vst [vmem:[#allocation5] sm:$0xff] %v43
    %46 = vst [vmem:[#allocation5 + $0x8] sm:$0xff] %v44
    // Predicated region
    $region10: #{tpu_custom_call.1} parent=1 // pred_check
      _
    $region11: #{tpu_custom_call.1} parent=1 // pred_check_branch
      %48 = sbr.rel (0) target = $region13
    $region12: #{tpu_custom_call.1} parent=1 // pred_region
      %50 = vsyncadd [#allocation4], 0
      %s51 = sshll.u32 [#allocation5], 4
      %s52 = int_to_ptr.vmem [resolvable:$true] %s51
      %s53 = sshll.u32 %s1, 4
      %s54 = int_to_ptr.hbm [resolvable:$true] %s53
      %59 = dma.vmem_to_hbm [thread:$0]  %s52, 256, %s54, [#allocation4], 128, 128, 8
    $region13: #{tpu_custom_call.1} parent=1 // pred_fallthru
      _
    // Predicated region
    $region14: #{tpu_custom_call.1} parent=1 // pred_check
      _
    $region15: #{tpu_custom_call.1} parent=1 // pred_check_branch
      %61 = sbr.rel (0) target = $region17
    $region16: #{tpu_custom_call.1} parent=1 // pred_region
      %63 = dma.done [#allocation4], 256
    $region17: #{tpu_custom_call.1} parent=1 // pred_fallthru
      _
    %64 = vsyncpa [#allocation3], 1
    %65 = vsyncpa [#allocation4], 1

</llo_original>
